<compile_context>
chip_gen: v5e
topology: v5e:2x2
jax: 0.10.0
libtpu: 0.0.40
codegen_flags: <defaults>
</compile_context>

<pallas_src>
import functools
import math

import jax
import jax.numpy as jnp
from jax import lax
from jax.experimental import pallas as pl
from jax.experimental.pallas import tpu as pltpu

ALPHA = 1.0
H = 0.7
EPS = 1e-7
PC_PREV = 0.0                 # self.pc at module init (fresh module)
LOG_H = math.log(H)           # gamma = log(1-k)/log(1-pc) - 1 == log(H)/log(1-pc)
TARGET_BLOCK_BYTES = 4 << 20  # ~4 MiB of logits per grid step (amortize per-step overhead)
# TODO(synk): the module's running `self.pc` EMA buffer is modelled as the fresh-init
# constant 0.0; thread it in as an extra (per-sample) input if stateful use is needed.


def _round_up(v, m):
    return (v + m - 1) // m * m


def _cdiv(a, b):
    return -(-a // b)


def _auto_focal_loss_kernel(x_ref, tgt_ref, out_ref, *, n_total):
    """Per-tile body: per-tile PARTIAL SUM of auto-focal losses for a (tile, C) block."""
    i = pl.program_id(0)
    x = x_ref[...].astype(jnp.float32)   # upcast: bf16 inputs halve HBM traffic on v5e/v6e
    tgt = tgt_ref[...]                   # (tile, 1) int32
    tn, c = x.shape

    # --- numerically-stable softmax; one exact reciprocal per ROW (not per element) ---
    m = jnp.max(x, axis=1, keepdims=True)                 # (tn, 1)
    e = jnp.exp(x - m)                                    # (tn, C)  EUP exp
    s = jnp.sum(e, axis=1, keepdims=True)                 # (tn, 1)
    inv_s = 1.0 / s
    logit = jnp.clip(e * inv_s, EPS, 1.0 - EPS)           # clamp(softmax), (tn, C)
    sum_logit = jnp.sum(logit, axis=1, keepdims=True)     # (tn, 1)

    # --- single full-width masked gather: everything at the target class derives from x_t ---
    class_ids = lax.broadcasted_iota(jnp.int32, (tn, c), 1)
    x_t = jnp.sum(jnp.where(class_ids == tgt, x, 0.0), axis=1, keepdims=True)  # (tn, 1)

    # --- per-row tail ---
    # TODO(synk): repack these (tile,1) row scalars into a lane-dense (tile/128,128) layout
    # to cut the ~5 per-row transcendentals' vreg count ~128x (matters most on v7x).
    ce = jnp.log(s) + m - x_t                                      # CE, reduction='none'
    p_t = jnp.clip(jnp.exp(x_t - m) * inv_s, EPS, 1.0 - EPS)       # clamped softmax at target
    mean_logit = sum_logit * (1.0 / c)
    pc = PC_PREV * 0.95 + mean_logit * 0.05
    gamma = LOG_H / jnp.log(1.0 - pc)       # == log(1 - (H*pc + 1 - H)) / log(1 - pc) - 1
    # (1 - p_t) >= EPS because of the clamp, so the log is safe.
    focal = ALPHA * ce * jnp.exp(gamma * jnp.log(1.0 - p_t))       # (tn, 1)

    # --- zero rows past the true N (ragged last tile; Pallas pads the OOB block rows) ---
    row_ids = i * tn + lax.broadcasted_iota(jnp.int32, (tn, 1), 0)
    focal = jnp.where(row_ids < n_total, focal, 0.0)

    # --- per-tile partial sum into one aligned (8,128) output block ---
    psum = jnp.sum(focal, axis=0, keepdims=True)                   # (1, 1)
    out_ref[...] = jnp.broadcast_to(psum.reshape(1, 1, 1), (1, 8, 128))


def _vmem_limit_bytes():
    """Generation-aware VMEM limit: ~48 MiB on v7x (64 MiB physical), 64 MiB on v5e/v6e."""
    cap = 64 << 20
    try:
        info = pltpu.get_tpu_info()
        cap = int(getattr(info, "vmem_capacity_bytes", cap) or cap)
    except Exception:
        pass
    return max(16 << 20, min(64 << 20, (cap * 3) // 4))


def _pick_tile_rows(n, c, requested, x_itemsize, vmem_limit):
    """Byte-targeted, VMEM-aware row tile; guarantees >=2 grid steps when N allows (v7x)."""
    c_pad = max(_round_up(c, 128), 128)
    # Per-row VMEM: double-buffered x block + lane-padded (tile,1) int32 target block
    # (x2 buffers) + ~6 live (tile, c_pad) f32 compiler temporaries in the body.
    per_row = 2 * c_pad * x_itemsize + 2 * 128 * 4 + 6 * c_pad * 4
    budget = int(vmem_limit * 0.6)
    cap_vmem = max(8, budget // per_row)
    # Keep each logits block around TARGET_BLOCK_BYTES: big enough to amortize the
    # ~0.35us per-step pipeline overhead, small enough to double-buffer comfortably.
    cap_bytes = max(8, TARGET_BLOCK_BYTES // (c_pad * x_itemsize))
    tile = min(requested, cap_vmem, cap_bytes, n)
    # Guarantee >=2 grid steps when possible so the "parallel" axis shards across both
    # v7x TensorCores (harmless on v5e/v6e: one extra ~0.35us grid step).
    if n >= 16:
        tile = min(tile, _round_up(_cdiv(n, 2), 8))
    if tile < n:
        tile = max(8, (tile // 8) * 8)   # multiple of 8 unless it equals the full dim
    return int(max(1, tile))


def auto_focal_loss(x, target, *, tile_rows=None):
    """x: (N, C) float32/bfloat16 logits, target: (N,) int class indices -> scalar loss."""
    n, c = x.shape
    tgt2d = target.astype(jnp.int32).reshape(n, 1)

    vmem_limit = _vmem_limit_bytes()
    requested = tile_rows if tile_rows is not None else (1 << 30)
    tile = _pick_tile_rows(n, c, requested, jnp.dtype(x.dtype).itemsize, vmem_limit)
    num_tiles = _cdiv(n, tile)

    partials = pl.pallas_call(
        functools.partial(_auto_focal_loss_kernel, n_total=n),
        out_shape=jax.ShapeDtypeStruct((num_tiles, 8, 128), jnp.float32),
        grid_spec=pltpu.PrefetchScalarGridSpec(
            num_scalar_prefetch=0,
            grid=(num_tiles,),
            in_specs=[
                pl.BlockSpec((tile, c), lambda i: (i, 0)),   # logits tile
                pl.BlockSpec((tile, 1), lambda i: (i, 0)),   # targets tile
            ],
            out_specs=pl.BlockSpec((1, 8, 128), lambda i: (i, 0, 0)),  # per-tile partial sum
        ),
        compiler_params=pltpu.CompilerParams(
            dimension_semantics=("parallel",),   # no cross-tile state -> shard over TCs
            vmem_limit_bytes=int(vmem_limit),
        ),
    )(x, tgt2d)

    # num_tiles partial sums -> scalar; divide by the TRUE N (ragged rows were zeroed).
    return jnp.sum(partials[:, 0, 0]) / n


def auto_focal_loss_ref(x, target):
    """Pure-JAX reference mirroring the PyTorch module."""
    softmax = jax.nn.softmax(x, axis=1)
    logit = jnp.clip(softmax, EPS, 1.0 - EPS)
    ce = -jax.nn.log_softmax(x, axis=1)[jnp.arange(x.shape[0]), target]
    pc = PC_PREV * 0.95 + jnp.mean(logit, axis=1) * 0.05
    k = H * pc + (1.0 - H)
    gamma = jnp.log(1.0 - k) / jnp.log(1.0 - pc) - 1.0
    p_t = logit[jnp.arange(x.shape[0]), target]
    loss = ALPHA * ce * (1.0 - p_t) ** gamma
    return jnp.mean(loss)


if __name__ == "__main__":
    # Case 1: batch=8, classes=8 (single full block).
    kx, kt = jax.random.split(jax.random.PRNGKey(0))
    N, C = 8, 8
    x = jax.random.normal(kx, (N, C), dtype=jnp.float32)
    target = jax.random.randint(kt, (N,), 0, C, dtype=jnp.int32)

    loss = auto_focal_loss(x, target)
    jax.block_until_ready(loss)
    ref = auto_focal_loss_ref(x, target)
    assert jnp.allclose(loss, ref, rtol=2e-5, atol=1e-6), (loss, ref)

    # Case 2: batch=20 with a forced 8-row tile -> 3 grid steps; the ragged last tile
    # exercises the row-validity mask, per-tile partial sums, and divide-by-true-N.
    kx2, kt2 = jax.random.split(jax.random.PRNGKey(1))
    N2, C2 = 20, 8
    x2 = jax.random.normal(kx2, (N2, C2), dtype=jnp.float32)
    target2 = jax.random.randint(kt2, (N2,), 0, C2, dtype=jnp.int32)

    loss2 = auto_focal_loss(x2, target2, tile_rows=8)
    jax.block_until_ready(loss2)
    ref2 = auto_focal_loss_ref(x2, target2)
    assert jnp.allclose(loss2, ref2, rtol=2e-5, atol=1e-6), (loss2, ref2)

    # Case 3: batch=300, classes=128, bf16 logits -> auto tile splits into 2 ragged tiles
    # (megacore path) and exercises the bf16 upcast and full-lane class axis.
    kx3, kt3 = jax.random.split(jax.random.PRNGKey(2))
    N3, C3 = 300, 128
    x3 = jax.random.normal(kx3, (N3, C3), dtype=jnp.float32).astype(jnp.bfloat16)
    target3 = jax.random.randint(kt3, (N3,), 0, C3, dtype=jnp.int32)

    loss3 = auto_focal_loss(x3, target3)
    jax.block_until_ready(loss3)
    ref3 = auto_focal_loss_ref(x3.astype(jnp.float32), target3)
    assert bool(jnp.isfinite(loss3)), loss3
    assert jnp.allclose(loss3, ref3, rtol=1e-3, atol=1e-6), (loss3, ref3)

    print("KERNEL_OK")
</pallas_src>

<mosaic_0001>
module attributes {stable_mosaic.version = 11 : i64} {
  func.func @_auto_focal_loss_kernel(%arg0: i32, %arg1: memref<8x8xf32, #tpu.memory_space<vmem>>, %arg2: memref<8x1xi32, #tpu.memory_space<vmem>>, %arg3: memref<1x8x128xf32, #tpu.memory_space<vmem>>) attributes {dimension_semantics = [#tpu.dimension_semantics<parallel>], iteration_bounds = array<i64: 1>, scalar_prefetch = 0 : i64, scratch_operands = 0 : i64, tpu.core_type = #tpu.core_type<tc>, window_params = [{transform_indices = @transform_0, window_bounds = array<i64: 8, 8>}, {transform_indices = @transform_1, window_bounds = array<i64: 8, 1>}, {transform_indices = @transform_2, window_bounds = array<i64: 1, 8, 128>}]} {
    %c0 = arith.constant 0 : index
    %c0_0 = arith.constant 0 : index
    %0 = vector.load %arg1[%c0, %c0_0] : memref<8x8xf32, #tpu.memory_space<vmem>>, vector<8x8xf32>
    %c0_1 = arith.constant 0 : index
    %c0_2 = arith.constant 0 : index
    %1 = vector.load %arg2[%c0_1, %c0_2] : memref<8x1xi32, #tpu.memory_space<vmem>>, vector<8x1xi32>
    %cst = arith.constant dense<0xFF800000> : vector<8xf32>
    %2 = vector.multi_reduction <maximumf>, %0, %cst [1] : vector<8x8xf32> to vector<8xf32>
    %3 = vector.shape_cast %2 : vector<8xf32> to vector<8x1xf32>
    %4 = vector.broadcast %3 : vector<8x1xf32> to vector<8x8xf32>
    %5 = arith.subf %0, %4 : vector<8x8xf32>
    %6 = math.exp %5 : vector<8x8xf32>
    %cst_3 = arith.constant dense<0.000000e+00> : vector<8xf32>
    %7 = vector.multi_reduction <add>, %6, %cst_3 [1] : vector<8x8xf32> to vector<8xf32>
    %8 = vector.shape_cast %7 : vector<8xf32> to vector<8x1xf32>
    %cst_4 = arith.constant 1.000000e+00 : f32
    %9 = vector.broadcast %cst_4 : f32 to vector<8x1xf32>
    %10 = arith.divf %9, %8 : vector<8x1xf32>
    %11 = vector.broadcast %10 : vector<8x1xf32> to vector<8x8xf32>
    %12 = arith.mulf %6, %11 : vector<8x8xf32>
    %cst_5 = arith.constant 1.000000e-07 : f32
    %cst_6 = arith.constant 0.99999988 : f32
    %13 = vector.broadcast %cst_5 : f32 to vector<8x8xf32>
    %14 = arith.maximumf %13, %12 : vector<8x8xf32>
    %15 = vector.broadcast %cst_6 : f32 to vector<8x8xf32>
    %16 = arith.minimumf %15, %14 : vector<8x8xf32>
    %cst_7 = arith.constant dense<0.000000e+00> : vector<8xf32>
    %17 = vector.multi_reduction <add>, %16, %cst_7 [1] : vector<8x8xf32> to vector<8xf32>
    %18 = vector.shape_cast %17 : vector<8xf32> to vector<8x1xf32>
    %19 = tpu.iota {dimensions = array<i32: 1>} : vector<8x8xi32>
    %20 = vector.broadcast %1 : vector<8x1xi32> to vector<8x8xi32>
    %21 = arith.cmpi eq, %19, %20 : vector<8x8xi32>
    %cst_8 = arith.constant 0.000000e+00 : f32
    %22 = vector.broadcast %cst_8 : f32 to vector<8x8xf32>
    %23 = arith.select %21, %0, %22 : vector<8x8xi1>, vector<8x8xf32>
    %cst_9 = arith.constant dense<0.000000e+00> : vector<8xf32>
    %24 = vector.multi_reduction <add>, %23, %cst_9 [1] : vector<8x8xf32> to vector<8xf32>
    %25 = vector.shape_cast %24 : vector<8xf32> to vector<8x1xf32>
    %26 = math.log %8 : vector<8x1xf32>
    %27 = arith.addf %26, %3 : vector<8x1xf32>
    %28 = arith.subf %27, %25 : vector<8x1xf32>
    %29 = arith.subf %25, %3 : vector<8x1xf32>
    %30 = math.exp %29 : vector<8x1xf32>
    %31 = arith.mulf %30, %10 : vector<8x1xf32>
    %cst_10 = arith.constant 1.000000e-07 : f32
    %cst_11 = arith.constant 0.99999988 : f32
    %32 = vector.broadcast %cst_10 : f32 to vector<8x1xf32>
    %33 = arith.maximumf %32, %31 : vector<8x1xf32>
    %34 = vector.broadcast %cst_11 : f32 to vector<8x1xf32>
    %35 = arith.minimumf %34, %33 : vector<8x1xf32>
    %cst_12 = arith.constant 1.250000e-01 : f32
    %36 = vector.broadcast %cst_12 : f32 to vector<8x1xf32>
    %37 = arith.mulf %18, %36 : vector<8x1xf32>
    %cst_13 = arith.constant 5.000000e-02 : f32
    %38 = vector.broadcast %cst_13 : f32 to vector<8x1xf32>
    %39 = arith.mulf %37, %38 : vector<8x1xf32>
    %cst_14 = arith.constant 0.000000e+00 : f32
    %40 = vector.broadcast %cst_14 : f32 to vector<8x1xf32>
    %41 = arith.addf %40, %39 : vector<8x1xf32>
    %cst_15 = arith.constant 1.000000e+00 : f32
    %42 = vector.broadcast %cst_15 : f32 to vector<8x1xf32>
    %43 = arith.subf %42, %41 : vector<8x1xf32>
    %44 = math.log %43 : vector<8x1xf32>
    %cst_16 = arith.constant -0.356674939 : f32
    %45 = vector.broadcast %cst_16 : f32 to vector<8x1xf32>
    %46 = arith.divf %45, %44 : vector<8x1xf32>
    %cst_17 = arith.constant 1.000000e+00 : f32
    %47 = vector.broadcast %cst_17 : f32 to vector<8x1xf32>
    %48 = arith.mulf %47, %28 : vector<8x1xf32>
    %cst_18 = arith.constant 1.000000e+00 : f32
    %49 = vector.broadcast %cst_18 : f32 to vector<8x1xf32>
    %50 = arith.subf %49, %35 : vector<8x1xf32>
    %51 = math.log %50 : vector<8x1xf32>
    %52 = arith.mulf %46, %51 : vector<8x1xf32>
    %53 = math.exp %52 : vector<8x1xf32>
    %54 = arith.mulf %48, %53 : vector<8x1xf32>
    %c8_i32 = arith.constant 8 : i32
    %55 = arith.muli %arg0, %c8_i32 : i32
    %56 = tpu.iota {dimensions = array<i32: 0>} : vector<8x1xi32>
    %57 = vector.broadcast %55 : i32 to vector<8x1xi32>
    %58 = arith.addi %57, %56 : vector<8x1xi32>
    %c8_i32_19 = arith.constant 8 : i32
    %59 = vector.broadcast %c8_i32_19 : i32 to vector<8x1xi32>
    %60 = arith.cmpi slt, %58, %59 : vector<8x1xi32>
    %cst_20 = arith.constant 0.000000e+00 : f32
    %61 = vector.broadcast %cst_20 : f32 to vector<8x1xf32>
    %62 = arith.select %60, %54, %61 : vector<8x1xi1>, vector<8x1xf32>
    %cst_21 = arith.constant dense<0.000000e+00> : vector<1xf32>
    %63 = vector.multi_reduction <add>, %62, %cst_21 [0] : vector<8x1xf32> to vector<1xf32>
    %64 = vector.shape_cast %63 : vector<1xf32> to vector<1x1xf32>
    %65 = vector.shape_cast %64 : vector<1x1xf32> to vector<1x1x1xf32>
    %66 = vector.shape_cast %65 : vector<1x1x1xf32> to vector<1x1x1xf32>
    %67 = vector.broadcast %66 : vector<1x1x1xf32> to vector<1x8x128xf32>
    %c0_22 = arith.constant 0 : index
    %c0_23 = arith.constant 0 : index
    %c0_24 = arith.constant 0 : index
    %68 = vector.load %arg3[%c0_22, %c0_23, %c0_24] : memref<1x8x128xf32, #tpu.memory_space<vmem>>, vector<1x8x128xf32>
    tpu.vector_store %arg3[%c0_22, %c0_23, %c0_24], %67 {strides = array<i32>} : memref<1x8x128xf32, #tpu.memory_space<vmem>>, vector<1x8x128xf32>,
    return
  }
  func.func @transform_0(%arg0: i32) -> (i32, i32) {
    %c0_i32 = arith.constant 0 : i32
    %c0_i32_0 = arith.constant 0 : i32
    return %arg0, %c0_i32 : i32, i32
  }
  func.func @transform_1(%arg0: i32) -> (i32, i32) {
    %c0_i32 = arith.constant 0 : i32
    %c0_i32_0 = arith.constant 0 : i32
    return %arg0, %c0_i32 : i32, i32
  }
  func.func @transform_2(%arg0: i32) -> (i32, i32, i32) {
    %c0_i32 = arith.constant 0 : i32
    %c0_i32_0 = arith.constant 0 : i32
    %c0_i32_1 = arith.constant 0 : i32
    return %arg0, %c0_i32, %c0_i32_0 : i32, i32, i32
  }
}

</mosaic_0001>

<llo_original>
// kernel: tpu_custom_call.1
$region0: #{tpu_custom_call.1}
  #allocation0 [shape = 'u32[]', space=smem, size = 0x4, offset = 0x4, fixed_abs, tag = 'smem constant byte address 0x4 - core index']
  #allocation1 [shape = 'u32[72,128]{1,0:T(1,128)}', space=vmem, size = 0x9000, scoped, tag = 'internal scratch']
  %s0 = inlined_call_operand.vmem [shape: f32[8,8], index: 0, kind: input, shape index: {}]
  %s1 = inlined_call_operand.vmem [shape: s32[8,1], index: 1, kind: input, shape index: {}]
  %s2 = inlined_call_operand.hbm [shape: f32[1,8,128], index: 2, kind: output, shape index: {}]
  %s3 = sld [smem:[#allocation0]]
  $region18: #{tpu_custom_call.1} parent=0
    _
  %s5 = ssub.s32 1, %s3
  %s6 = scalar_select 0, %s5, %s3
  $region1: #{tpu_custom_call.1} parent=0
    #allocation2 [shape = 'u8[4096]{0}', space=vmem, size = 0x1000, scoped, tag = 'output window, operand 0, single buffered']
    #allocation3 [shape = 's32[1]{0}', space=sflag, size = 0x4, scoped, tag = 'scoped memory for tpu_custom_call.1']
    %7 = vsyncpa [#allocation3], 0
    // Predicated region
    $region2: #{tpu_custom_call.1} parent=1 // pred_check
      _
    $region3: #{tpu_custom_call.1} parent=1 // pred_check_branch
      %9 = sbr.rel (0) target = $region5
    $region4: #{tpu_custom_call.1} parent=1 // pred_region
      _
    $region5: #{tpu_custom_call.1} parent=1 // pred_fallthru
      _
    // Predicated region
    $region6: #{tpu_custom_call.1} parent=1 // pred_check
      _
    $region7: #{tpu_custom_call.1} parent=1 // pred_check_branch
      %11 = sbr.rel (0) target = $region9
    $region8: #{tpu_custom_call.1} parent=1 // pred_region
      _
    $region9: #{tpu_custom_call.1} parent=1 // pred_fallthru
      _
    %v12 = vld [vmem:[%s0] sm:$0xff]
    %v13 = vld [vmem:[%s1] sm:$0xff]
    %vm14 = vcmask 64512
    %v15 = vsel %vm14, %v12, -inf
    %16 = vmax.xlane.f32.xlu0 %v15
    %v17 = vpop.xlane.xlu0 %16
    %v18 = vsub.f32 %v12, %v17
    %v19 = vmul.f32 %v18, 1.442695
    %v20 = vpow.pop %v19
    %v21 = vsel %vm14, %v20, 0.0
    %22 = vadd.xlane.f32.xlu0 %v21
    %v23 = vpop.xlane.xlu0 %22
    %v24 = vrcp.pop %v23
    %v25 = vmul.f32 %v23, %v24
    %v26 = vsub.f32 1.0, %v25
    %v27 = vmul.f32 %v24, %v26
    %v28 = vadd.f32 %v24, %v27
    %vm29 = vweird.f32 %v23
    %vm30 = vweird.f32 %v24
    %vm31 = vmor %vm29, %vm30
    %v32 = vsel %vm31, %v24, %v28
    %v33 = vand.u32 2147483647, %v23
    %vm34 = vcmp.eq.f32.partialorder %v33, 8.507059e+37
    %v35 = vand.u32 %v23, 2147483648
    %v36 = vor.u32 1.1754944e-38, %v35
    %v37 = vsel %vm34, %v36, %v32
    %v38 = vmul.f32 1.0, %v37
    %v39 = vmul.f32 %v20, %v38
    %v40 = vmax.f32 %v39, 1e-07
    %v41 = vmin.f32 %v40, 0.9999999
    %v42 = vsel %vm14, %v41, 0.0
    %43 = vadd.xlane.f32.xlu0 %v42
    %v44 = vpop.xlane.xlu0 %43
    %v45 = vlaneseq
    %v46 = vand.u32 %v45, 127
    %47 = vset.pattern.permute.xlu0 0
    %48 = vperm.xlu0 %47, %v13
    %v49 = vpop.permute.xlu0 %48
    %vm50 = vcmp.eq.s32.totalorder %v46, %v49
    %v51 = vsel %vm50, %v12, 0.0
    %v52 = vsel %vm14, %v51, 0.0
    %53 = vadd.xlane.f32.xlu0 %v52
    %v54 = vpop.xlane.xlu0 %53
    %v55 = vlog2.pop %v23
    %v56 = vmul.f32 %v55, 0.6931472
    %v57 = vadd.f32 %v56, %v17
    %v58 = vsub.f32 %v57, %v54
    %v59 = vsub.f32 %v54, %v17
    %v60 = vmul.f32 %v59, 1.442695
    %v61 = vpow.pop %v60
    %v62 = vmul.f32 %v61, %v38
    %v63 = vmax.f32 %v62, 1e-07
    %v64 = vmin.f32 %v63, 0.9999999
    %v65 = vmul.f32 %v44, 0.125
    %v66 = vmul.f32 %v65, 0.05
    %v67 = vadd.f32 %v66, 0.0
    %v68 = vsub.f32 1.0, %v67
    %v69 = vlog2.pop %v68
    %v70 = vmul.f32 %v69, 0.6931472
    %v71 = vrcp.pop %v70
    %v72 = vmul.f32 %v70, %v71
    %v73 = vsub.f32 1.0, %v72
    %v74 = vmul.f32 %v71, %v73
    %v75 = vadd.f32 %v71, %v74
    %vm76 = vweird.f32 %v70
    %vm77 = vweird.f32 %v71
    %vm78 = vmor %vm76, %vm77
    %v79 = vsel %vm78, %v71, %v75
    %v80 = vand.u32 2147483647, %v70
    %vm81 = vcmp.eq.f32.partialorder %v80, 8.507059e+37
    %v82 = vand.u32 %v70, 2147483648
    %v83 = vor.u32 1.1754944e-38, %v82
    %v84 = vsel %vm81, %v83, %v79
    %v85 = vmul.f32 -0.35667494, %v84
    %v86 = vsub.f32 1.0, %v64
    %v87 = vlog2.pop %v86
    %v88 = vmul.f32 %v87, 0.6931472
    %v89 = vmul.f32 %v85, %v88
    %v90 = vmul.f32 %v89, 1.442695
    %v91 = vpow.pop %v90
    %v92 = vmul.f32 %v58, %v91
    %s93 = smul.u32 0, 8
    %v94 = vlaneseq
    %v95 = vshrl.u32 %v94, 7
    %v96 = vstv %s93
    %v97 = vadd.s32 %v96, %v95
    %vm98 = vcmp.lt.s32.totalorder %v97, 8
    %v99 = vsel %vm98, %v92, 0.0
    %v100 = vrot.slane %v99, 4
    %v101 = vadd.f32 %v99, %v100
    %v102 = vrot.slane %v101, 2
    %v103 = vadd.f32 %v101, %v102
    %v104 = vrot.slane %v103, 1
    %v105 = vadd.f32 %v103, %v104
    %106 = vst [vmem:[#allocation2] sm:$0xff] %v105
    // Predicated region
    $region10: #{tpu_custom_call.1} parent=1 // pred_check
      _
    $region11: #{tpu_custom_call.1} parent=1 // pred_check_branch
      %108 = sbr.rel (0) target = $region13
    $region12: #{tpu_custom_call.1} parent=1 // pred_region
      %110 = vsyncadd [#allocation3], 0
      %s112 = sshll.u32 [#allocation2], 4
      %s113 = int_to_ptr.vmem [resolvable:$true] %s112
      %s114 = sshll.u32 %s2, 4
      %s115 = int_to_ptr.hbm [resolvable:$true] %s114
      %117 = dma.vmem_to_hbm [thread:$0]  %s113, 128, %s115, [#allocation3]
    $region13: #{tpu_custom_call.1} parent=1 // pred_fallthru
      _
    // Predicated region
    $region14: #{tpu_custom_call.1} parent=1 // pred_check
      _
    $region15: #{tpu_custom_call.1} parent=1 // pred_check_branch
      %119 = sbr.rel (0) target = $region17
    $region16: #{tpu_custom_call.1} parent=1 // pred_region
      %121 = dma.done [#allocation3], 128
    $region17: #{tpu_custom_call.1} parent=1 // pred_fallthru
      _
    %122 = vsyncpa [#allocation3], 1

</llo_original>
